<compile_context>
chip_gen: v7x
topology: tpu7x:2x2x1
jax: 0.10.0
libtpu: 0.0.40
codegen_flags: <defaults>
</compile_context>

<pallas_src>
import functools

import jax
import jax.numpy as jnp
from jax.experimental import pallas as pl
from jax.experimental.pallas import tpu as pltpu


_VMEM_TILE_BUDGET = 24 * 1024 * 1024   # conservative: fits v7x scoped VMEM


def _pick_seq_tile(s_len, c_in, c_out, x_itemsize, w_itemsize, max_tile):
    """Largest sequence tile (multiple of 8, <= max_tile) fitting the budget."""
    # Resident / fixed VMEM (pessimistically double-buffered): weight, bias,
    # output block, scratch accumulators.
    fixed = (2 * c_in * c_out * w_itemsize      # projector weight
             + 2 * 128 * 4                      # bias block (lane padded)
             + 2 * max(c_out, 128) * 4          # output block
             + 8 * c_in * 4 + 8 * 128 * 4)      # acc_x + acc_m scratch
    # Per-token VMEM: double-buffered x tile + double-buffered validity column
    # (the (tS,1) mask block is lane-padded to 128 lanes in VMEM).
    per_token = 2 * c_in * x_itemsize + 2 * 128 * 4
    avail = max(_VMEM_TILE_BUDGET - fixed, 8 * per_token)
    t = avail // per_token
    t = min(int(t), int(max_tile), int(s_len))
    t = max(8, (t // 8) * 8)
    return int(t)


def _weighted_head_pool_kernel(x_ref, m_ref, w_ref, b_ref, o_ref,
                               acc_x_ref, acc_m_ref):
    """Grid: (B, cdiv(S, tS)).  Stream x + validity column, accumulate masked
    per-8-row partial sums (pure VPU adds) and the valid-token count; project,
    add bias and divide only once, on the last sequence step."""
    s = pl.program_id(1)

    @pl.when(s == 0)
    def _():
        acc_x_ref[...] = jnp.zeros_like(acc_x_ref)
        acc_m_ref[...] = jnp.zeros_like(acc_m_ref)

    x = x_ref[0].astype(jnp.float32)          # (tS, Cin)
    m = m_ref[0]                              # (tS, 1) f32: 1.0 valid, 0.0 masked/pad
    t_s, c_in = x.shape

    # Invalid tokens, ragged-tail rows and undefined out-of-bounds rows all
    # carry m == 0; jnp.where (not multiply) so garbage NaN/Inf can't leak.
    xv = jnp.where(m > 0.0, x, 0.0)

    # Fold rows in groups of 8 with pure VPU adds; the cross-sublane (XLU)
    # reduce happens only once, at finalize.
    acc_x_ref[...] += jnp.sum(xv.reshape(t_s // 8, 8, c_in), axis=0)
    acc_m_ref[...] += jnp.sum(m.reshape(t_s // 8, 8, 1), axis=0)

    @pl.when(s == pl.num_programs(1) - 1)
    def _():
        sum_x = jnp.sum(acc_x_ref[...], axis=0, keepdims=True)        # (1, Cin)
        cnt = jnp.maximum(jnp.sum(acc_m_ref[...], axis=0, keepdims=True), 1.0)
        mean_x = sum_x / cnt                                          # (1, Cin)
        w = w_ref[...]
        y = jnp.dot(mean_x.astype(w.dtype), w,
                    preferred_element_type=jnp.float32)               # (1, Cout)
        y = y + b_ref[...]
        o_ref[0] = y.astype(o_ref.dtype)


@functools.partial(jax.jit, static_argnames=("input_dtype", "max_seq_tile"))
def weighted_head_pool(tensors, mask, weight, bias, *, input_dtype=None,
                       max_seq_tile=1024):
    """tensors: (B, H, W, Cin) or (B, S, Cin) float32
       mask:    (B, H, W)      or (B, S)      bool (True == masked-out)
       weight:  (Cin, Cout)  (transpose of torch nn.Linear.weight)
       bias:    (Cout,)
       returns: (B, Cout) float32 — masked mean over valid tokens of (x@W + b)
    """
    if tensors.ndim == 4:
        B, H, W, Cin = tensors.shape
        tensors = tensors.reshape(B, H * W, Cin)
        mask = mask.reshape(B, H * W)
    B, S, Cin = tensors.shape
    Cout = weight.shape[1]

    if input_dtype is not None:                 # e.g. bf16 on v6e / v7x
        tensors = tensors.astype(input_dtype)
        weight = weight.astype(input_dtype)
    bias2d = bias.reshape(1, Cout).astype(jnp.float32)

    # x streams unpadded; only pathological S < 8 gets a tiny zero pad so the
    # (8,·) block-sublane minimum is satisfied.
    if S < 8:
        tensors = jnp.pad(tensors, ((0, 0), (0, 8 - S), (0, 0)))
    S_x = tensors.shape[1]

    x_itemsize = jnp.dtype(tensors.dtype).itemsize
    w_itemsize = jnp.dtype(weight.dtype).itemsize
    tS = _pick_seq_tile(S_x, Cin, Cout, x_itemsize, w_itemsize, max_seq_tile)
    grid_s = pl.cdiv(S_x, tS)

    # Validity stream: 1.0 = keep, 0.0 = masked-out / padding.  Padded so every
    # mask block is fully defined (it also neutralises the undefined tail rows
    # of the last, possibly out-of-bounds, x block).  Tiny: 4 B per token.
    S_m = grid_s * tS
    valid = jnp.logical_not(mask).astype(jnp.float32)                 # (B, S)
    valid = jnp.pad(valid, ((0, 0), (0, S_m - S))).reshape(B, S_m, 1)

    out = pl.pallas_call(
        _weighted_head_pool_kernel,
        out_shape=jax.ShapeDtypeStruct((B, 1, Cout), jnp.float32),
        grid_spec=pltpu.PrefetchScalarGridSpec(
            num_scalar_prefetch=0,
            grid=(B, grid_s),
            in_specs=[
                pl.BlockSpec((1, tS, Cin), lambda b, s: (b, s, 0)),   # x
                pl.BlockSpec((1, tS, 1), lambda b, s: (b, s, 0)),     # validity
                pl.BlockSpec((Cin, Cout), lambda b, s: (0, 0)),       # W (resident)
                pl.BlockSpec((1, Cout), lambda b, s: (0, 0)),         # bias
            ],
            out_specs=pl.BlockSpec((1, 1, Cout), lambda b, s: (b, 0, 0)),
            scratch_shapes=[pltpu.VMEM((8, Cin), jnp.float32),        # partial sums
                            pltpu.VMEM((8, 1), jnp.float32)],         # partial counts
        ),
        compiler_params=pltpu.CompilerParams(
            dimension_semantics=("parallel", "arbitrary"),
            vmem_limit_bytes=32 * 1024 * 1024,
        ),
    )(tensors, valid, weight, bias2d)

    return out.reshape(B, Cout)


def _reference(tensors, mask, weight, bias):
    """Pure-JAX reference mirroring pool_one_level(projector(x), ~mask)."""
    if tensors.ndim == 4:
        B = tensors.shape[0]
        tensors = tensors.reshape(B, -1, tensors.shape[-1])
        mask = mask.reshape(B, -1)
    y = tensors @ weight + bias                                       # projector
    valid = jnp.logical_not(mask)[..., None].astype(jnp.float32)
    cnt = jnp.maximum(valid.sum(axis=1), 1.0)
    return (y * valid).sum(axis=1) / cnt                              # feat[m].mean(0)


if __name__ == "__main__":
    key = jax.random.PRNGKey(0)
    k1, k2, k3, k4, k5, k6 = jax.random.split(key, 6)

    # ---- test 1: 4D (B, H, W, Cin) input, f32 -------------------------------
    B, H, W, Cin, Cout = 2, 4, 4, 32, 32
    x = jax.random.normal(k1, (B, H, W, Cin), dtype=jnp.float32)
    mask = jax.random.bernoulli(k2, p=0.3, shape=(B, H, W))
    mask = mask.at[:, 0, 0].set(False)          # guarantee >=1 valid token
    bound = 1.0 / (Cin ** 0.5)
    weight = jax.random.uniform(k3, (Cin, Cout), jnp.float32, -bound, bound)
    bias = jax.random.uniform(k4, (Cout,), jnp.float32, -bound, bound)

    out = jax.block_until_ready(weighted_head_pool(x, mask, weight, bias))
    ref = _reference(x, mask, weight, bias)
    assert out.shape == (B, Cout)
    assert jnp.allclose(out, ref, rtol=1e-4, atol=1e-4), (
        f"test1 max err = {jnp.max(jnp.abs(out - ref))}")

    # ---- test 2: 3D input, ragged S=37 -> multi-step grid, tail handled by
    # the zero-padded validity stream (x itself is NOT padded) ----------------
    B2, S2, Cin2, Cout2 = 2, 37, 32, 48
    x2 = jax.random.normal(k5, (B2, S2, Cin2), dtype=jnp.float32)
    mask2 = jax.random.bernoulli(k6, p=0.4, shape=(B2, S2))
    mask2 = mask2.at[:, 0].set(False)
    bound2 = 1.0 / (Cin2 ** 0.5)
    weight2 = jax.random.uniform(k3, (Cin2, Cout2), jnp.float32, -bound2, bound2)
    bias2 = jax.random.uniform(k4, (Cout2,), jnp.float32, -bound2, bound2)

    out2 = jax.block_until_ready(
        weighted_head_pool(x2, mask2, weight2, bias2, max_seq_tile=16))
    ref2 = _reference(x2, mask2, weight2, bias2)
    assert out2.shape == (B2, Cout2)
    assert jnp.allclose(out2, ref2, rtol=1e-4, atol=1e-4), (
        f"test2 max err = {jnp.max(jnp.abs(out2 - ref2))}")

    # ---- test 3: bf16 input stream (v6e/v7x bandwidth option), f32 accum ----
    out3 = jax.block_until_ready(
        weighted_head_pool(x, mask, weight, bias, input_dtype=jnp.bfloat16))
    assert jnp.allclose(out3, ref, rtol=5e-2, atol=5e-2), (
        f"test3 max err = {jnp.max(jnp.abs(out3 - ref))}")

    print("KERNEL_OK")
</pallas_src>

<mosaic_0001>
module attributes {stable_mosaic.version = 11 : i64} {
  func.func @_weighted_head_pool_kernel(%arg0: i32, %arg1: i32, %arg2: memref<1x16x32xf32, #tpu.memory_space<vmem>>, %arg3: memref<1x16x1xf32, #tpu.memory_space<vmem>>, %arg4: memref<32x32xf32, #tpu.memory_space<vmem>>, %arg5: memref<1x32xf32, #tpu.memory_space<vmem>>, %arg6: memref<1x1x32xf32, #tpu.memory_space<vmem>>, %arg7: memref<8x32xf32, #tpu.memory_space<vmem>>, %arg8: memref<8x1xf32, #tpu.memory_space<vmem>>) attributes {dimension_semantics = [#tpu.dimension_semantics<parallel>, #tpu.dimension_semantics<arbitrary>], iteration_bounds = array<i64: 2, 1>, scalar_prefetch = 0 : i64, scratch_operands = 2 : i64, tpu.core_type = #tpu.core_type<tc>, window_params = [{transform_indices = @transform_0, window_bounds = array<i64: 1, 16, 32>}, {transform_indices = @transform_1, window_bounds = array<i64: 1, 16, 1>}, {pipeline_mode = #tpu.pipeline_mode<synchronous>, transform_indices = @transform_2, window_bounds = array<i64: 32, 32>}, {pipeline_mode = #tpu.pipeline_mode<synchronous>, transform_indices = @transform_3, window_bounds = array<i64: 1, 32>}, {transform_indices = @transform_4, window_bounds = array<i64: 1, 1, 32>}]} {
    %c0_i32 = arith.constant 0 : i32
    %0 = arith.cmpi eq, %arg1, %c0_i32 : i32
    %1 = arith.extui %0 : i1 to i32
    %c0_i32_0 = arith.constant 0 : i32
    %2 = arith.cmpi ne, %1, %c0_i32_0 : i32
    scf.if %2 {
      %cst_19 = arith.constant 0.000000e+00 : f32
      %26 = vector.broadcast %cst_19 : f32 to vector<8x32xf32>
      %c0_20 = arith.constant 0 : index
      %c0_21 = arith.constant 0 : index
      %27 = vector.load %arg7[%c0_20, %c0_21] : memref<8x32xf32, #tpu.memory_space<vmem>>, vector<8x32xf32>
      tpu.vector_store %arg7[%c0_20, %c0_21], %26 {strides = array<i32>} : memref<8x32xf32, #tpu.memory_space<vmem>>, vector<8x32xf32>,
      %cst_22 = arith.constant 0.000000e+00 : f32
      %28 = vector.broadcast %cst_22 : f32 to vector<8x1xf32>
      %c0_23 = arith.constant 0 : index
      %c0_24 = arith.constant 0 : index
      %29 = vector.load %arg8[%c0_23, %c0_24] : memref<8x1xf32, #tpu.memory_space<vmem>>, vector<8x1xf32>
      tpu.vector_store %arg8[%c0_23, %c0_24], %28 {strides = array<i32>} : memref<8x1xf32, #tpu.memory_space<vmem>>, vector<8x1xf32>,
    } else {
    }
    %c0 = arith.constant 0 : index
    %c0_1 = arith.constant 0 : index
    %c0_2 = arith.constant 0 : index
    %3 = vector.load %arg2[%c0, %c0_1, %c0_2] : memref<1x16x32xf32, #tpu.memory_space<vmem>>, vector<1x16x32xf32>
    %4 = vector.shape_cast %3 : vector<1x16x32xf32> to vector<16x32xf32>
    %c0_3 = arith.constant 0 : index
    %c0_4 = arith.constant 0 : index
    %c0_5 = arith.constant 0 : index
    %5 = vector.load %arg3[%c0_3, %c0_4, %c0_5] : memref<1x16x1xf32, #tpu.memory_space<vmem>>, vector<1x16x1xf32>
    %6 = vector.shape_cast %5 : vector<1x16x1xf32> to vector<16x1xf32>
    %cst = arith.constant 0.000000e+00 : f32
    %7 = vector.broadcast %cst : f32 to vector<16x1xf32>
    %8 = arith.cmpf ogt, %6, %7 : vector<16x1xf32>
    %cst_6 = arith.constant 0.000000e+00 : f32
    %9 = vector.shape_cast %8 : vector<16x1xi1> to vector<16x1xi1>
    %10 = vector.broadcast %9 : vector<16x1xi1> to vector<16x32xi1>
    %11 = vector.broadcast %cst_6 : f32 to vector<16x32xf32>
    %12 = arith.select %10, %4, %11 : vector<16x32xi1>, vector<16x32xf32>
    %c0_7 = arith.constant 0 : index
    %c0_8 = arith.constant 0 : index
    %13 = vector.load %arg7[%c0_7, %c0_8] : memref<8x32xf32, #tpu.memory_space<vmem>>, vector<8x32xf32>
    %14 = vector.shape_cast %12 : vector<16x32xf32> to vector<2x8x32xf32>
    %cst_9 = arith.constant dense<0.000000e+00> : vector<8x32xf32>
    %15 = vector.multi_reduction <add>, %14, %cst_9 [0] : vector<2x8x32xf32> to vector<8x32xf32>
    %16 = arith.addf %13, %15 : vector<8x32xf32>
    %c0_10 = arith.constant 0 : index
    %c0_11 = arith.constant 0 : index
    %17 = vector.load %arg7[%c0_10, %c0_11] : memref<8x32xf32, #tpu.memory_space<vmem>>, vector<8x32xf32>
    tpu.vector_store %arg7[%c0_10, %c0_11], %16 {strides = array<i32>} : memref<8x32xf32, #tpu.memory_space<vmem>>, vector<8x32xf32>,
    %c0_12 = arith.constant 0 : index
    %c0_13 = arith.constant 0 : index
    %18 = vector.load %arg8[%c0_12, %c0_13] : memref<8x1xf32, #tpu.memory_space<vmem>>, vector<8x1xf32>
    %19 = vector.shape_cast %6 : vector<16x1xf32> to vector<2x8x1xf32>
    %cst_14 = arith.constant dense<0.000000e+00> : vector<8x1xf32>
    %20 = vector.multi_reduction <add>, %19, %cst_14 [0] : vector<2x8x1xf32> to vector<8x1xf32>
    %21 = arith.addf %18, %20 : vector<8x1xf32>
    %c0_15 = arith.constant 0 : index
    %c0_16 = arith.constant 0 : index
    %22 = vector.load %arg8[%c0_15, %c0_16] : memref<8x1xf32, #tpu.memory_space<vmem>>, vector<8x1xf32>
    tpu.vector_store %arg8[%c0_15, %c0_16], %21 {strides = array<i32>} : memref<8x1xf32, #tpu.memory_space<vmem>>, vector<8x1xf32>,
    %c0_i32_17 = arith.constant 0 : i32
    %23 = arith.cmpi eq, %arg1, %c0_i32_17 : i32
    %24 = arith.extui %23 : i1 to i32
    %c0_i32_18 = arith.constant 0 : i32
    %25 = arith.cmpi ne, %24, %c0_i32_18 : i32
    scf.if %25 {
      %c0_19 = arith.constant 0 : index
      %c0_20 = arith.constant 0 : index
      %26 = vector.load %arg7[%c0_19, %c0_20] : memref<8x32xf32, #tpu.memory_space<vmem>>, vector<8x32xf32>
      %cst_21 = arith.constant dense<0.000000e+00> : vector<32xf32>
      %27 = vector.multi_reduction <add>, %26, %cst_21 [0] : vector<8x32xf32> to vector<32xf32>
      %28 = vector.shape_cast %27 : vector<32xf32> to vector<1x32xf32>
      %c0_22 = arith.constant 0 : index
      %c0_23 = arith.constant 0 : index
      %29 = vector.load %arg8[%c0_22, %c0_23] : memref<8x1xf32, #tpu.memory_space<vmem>>, vector<8x1xf32>
      %cst_24 = arith.constant dense<0.000000e+00> : vector<1xf32>
      %30 = vector.multi_reduction <add>, %29, %cst_24 [0] : vector<8x1xf32> to vector<1xf32>
      %31 = vector.shape_cast %30 : vector<1xf32> to vector<1x1xf32>
      %cst_25 = arith.constant 1.000000e+00 : f32
      %32 = vector.broadcast %cst_25 : f32 to vector<1x1xf32>
      %33 = arith.maximumf %31, %32 : vector<1x1xf32>
      %34 = vector.broadcast %33 : vector<1x1xf32> to vector<1x32xf32>
      %35 = arith.divf %28, %34 : vector<1x32xf32>
      %c0_26 = arith.constant 0 : index
      %c0_27 = arith.constant 0 : index
      %36 = vector.load %arg4[%c0_26, %c0_27] : memref<32x32xf32, #tpu.memory_space<vmem>>, vector<32x32xf32>
      %cst_28 = arith.constant dense<0.000000e+00> : vector<1x32xf32>
      %37 = tpu.matmul %35, %36, %cst_28 {dimension_numbers = #tpu.dot_dimension_numbers<[1], [0], [0], [1], [0, 0, 1, 1], [], []>} : vector<1x32xf32>, vector<32x32xf32>, vector<1x32xf32> -> vector<1x32xf32>
      %c0_29 = arith.constant 0 : index
      %c0_30 = arith.constant 0 : index
      %38 = vector.load %arg5[%c0_29, %c0_30] : memref<1x32xf32, #tpu.memory_space<vmem>>, vector<1x32xf32>
      %39 = arith.addf %37, %38 : vector<1x32xf32>
      %c0_31 = arith.constant 0 : index
      %c0_32 = arith.constant 0 : index
      %c0_33 = arith.constant 0 : index
      %40 = vector.load %arg6[%c0_31, %c0_32, %c0_33] : memref<1x1x32xf32, #tpu.memory_space<vmem>>, vector<1x1x32xf32>
      %41 = vector.shape_cast %40 : vector<1x1x32xf32> to vector<1x32xf32>
      %42 = vector.shape_cast %39 : vector<1x32xf32> to vector<1x1x32xf32>
      tpu.vector_store %arg6[%c0_31, %c0_32, %c0_33], %42 {strides = array<i32>} : memref<1x1x32xf32, #tpu.memory_space<vmem>>, vector<1x1x32xf32>,
    } else {
    }
    return
  }
  func.func @transform_0(%arg0: i32, %arg1: i32) -> (i32, i32, i32) {
    %c0_i32 = arith.constant 0 : i32
    %c0_i32_0 = arith.constant 0 : i32
    return %arg0, %arg1, %c0_i32 : i32, i32, i32
  }
  func.func @transform_1(%arg0: i32, %arg1: i32) -> (i32, i32, i32) {
    %c0_i32 = arith.constant 0 : i32
    %c0_i32_0 = arith.constant 0 : i32
    return %arg0, %arg1, %c0_i32 : i32, i32, i32
  }
  func.func @transform_2(%arg0: i32, %arg1: i32) -> (i32, i32) {
    %c0_i32 = arith.constant 0 : i32
    %c0_i32_0 = arith.constant 0 : i32
    %c0_i32_1 = arith.constant 0 : i32
    return %c0_i32, %c0_i32_0 : i32, i32
  }
  func.func @transform_3(%arg0: i32, %arg1: i32) -> (i32, i32) {
    %c0_i32 = arith.constant 0 : i32
    %c0_i32_0 = arith.constant 0 : i32
    %c0_i32_1 = arith.constant 0 : i32
    return %c0_i32, %c0_i32_0 : i32, i32
  }
  func.func @transform_4(%arg0: i32, %arg1: i32) -> (i32, i32, i32) {
    %c0_i32 = arith.constant 0 : i32
    %c0_i32_0 = arith.constant 0 : i32
    %c0_i32_1 = arith.constant 0 : i32
    return %arg0, %c0_i32, %c0_i32_0 : i32, i32, i32
  }
}

</mosaic_0001>

<llo_original>
// kernel: weighted_head_pool.1
$region0: #{weighted_head_pool.1}
  #allocation0 [shape = 'u32[]', space=smem, size = 0x4, offset = 0x4, fixed_abs, tag = 'smem constant byte address 0x4 - core index']
  #allocation1 [shape = 'u32[144,128]{1,0:T(1,128)}', space=vmem, size = 0x12000, scoped, tag = 'internal scratch']
  #allocation2 [shape = 'f32[8,32]{1,0:T(8,128)}', space=vmem, size = 0x1000, scoped, tag = 'scratch operand']
  #allocation3 [shape = 'f32[8,1]{1,0:T(8,128)}', space=vmem, size = 0x1000, scoped, tag = 'scratch operand']
  %s0 = inlined_call_operand.vmem [shape: f32[2,16,32], index: 0, kind: input, shape index: {}]
  %s1 = inlined_call_operand.vmem [shape: f32[2,16,1], index: 1, kind: input, shape index: {}]
  %s2 = inlined_call_operand.vmem [shape: f32[32,32], index: 2, kind: input, shape index: {}]
  %s3 = inlined_call_operand.vmem [shape: f32[1,32], index: 3, kind: input, shape index: {}]
  %s4 = inlined_call_operand.hbm [shape: f32[2,1,32], index: 4, kind: output, shape index: {}]
  %s5 = sld [smem:[#allocation0]]
  $region57: #{weighted_head_pool.1} parent=0
    _
  %s7 = ssub.s32 1, %s5
  %s8 = scalar_select 0, %s7, %s5
  $region1: #{weighted_head_pool.1} parent=0
    #allocation4 [shape = 'u8[1024]{0}', space=vmem, size = 0x400, scoped, tag = 'output window, operand 0']
    #allocation5 [shape = 's32[2]{0}', space=sflag, size = 0x8, scoped, tag = 'scoped memory for weighted_head_pool.1']
    %9 = vsyncpa [#allocation5], 0
    %s10 = scalar_lea.sflag [#allocation5], 1
    %11 = vsyncpa %s10, 0
    loop: start=0, step=1, limit=4
    $region2: #{weighted_head_pool.1} parent=1 // loop_pre_header
      _
    $region3: #{weighted_head_pool.1} parent=1 // loop_header
      %s13 = sphi 0, %s17
      %p14 = scmp.ge.s32.totalorder %s13, 4
      %s20 = sphi 0, %s32
      %s21 = sphi 0, %s28
      %s22 = sphi 0, %s20
      %s23 = sphi 0, %s21
      %s24 = sphi 0, %s22
      %s25 = sphi 0, %s23
      %s37 = sphi 0, %s39
      %s40 = sphi 0, %s37
      %s41 = sphi 0, %s40
      %s57 = sphi 0, %s41
      %s65 = sphi 0, %s67
      %s68 = sphi 0, %s65
      %s69 = sphi 0, %s68
      %s85 = sphi 0, %s69
      %s89 = sphi 0, %s89
      %s91 = sphi 0, %s89
      %s92 = sphi 0, %s91
      %s106 = sphi 0, %s92
      %s110 = sphi 0, %s110
      %s112 = sphi 0, %s110
      %s113 = sphi 0, %s112
      %s127 = sphi 0, %s113
      %s133 = sphi 0, %s135
      %s136 = sphi 0, %s133
      %s137 = sphi 0, %s136
      %s153 = sphi 0, %s137
    $region4: #{weighted_head_pool.1} parent=1 // loop_header_branch
      %16 = sbr.rel (%p14) target = $region8
    $region5: #{weighted_head_pool.1} parent=1 // loop_body
      %s18 = ssub.s32 %s13, 1
      %s19 = ssub.s32 %s13, 2
      %s26 = sadd.s32 1, %s21
      %p27 = scmp.ge.s32.totalorder %s26, 1
      %s28 = scalar_select %p27, 0, %s26
      %s29 = sadd.s32 1, %s20
      %s30 = scalar_select %p27, %s29, %s20
      %p31 = scmp.ge.s32.totalorder %s30, 2
      %s32 = scalar_select %p31, 0, %s30
      %s33 = ssub.s32 %s20, %s32
      %s34 = ssub.s32 %s21, %s28
      %s35 = sor.u32 %s33, %s34
      %p36 = scmp.eq.s32.totalorder %s35, 0
      %s38 = sadd.s32 %s37, 1
      %s39 = scalar_select %p36, %s37, %s38
      %p42 = pneg %p36
      %p43 = scmp.eq.s32.totalorder %s13, 1
      %p44 = por %p42, %p43
      %p45 = scmp.ne.s32.totalorder %s37, %s40
      %p46 = scmp.eq.s32.totalorder %s13, 0
      %p47 = por %p45, %p46
      %p48 = scmp.ne.s32.totalorder %s37, %s40
      %p49 = scmp.eq.s32.totalorder %s18, 1
      %p50 = por %p48, %p49
      %p51 = scmp.ne.s32.totalorder %s40, %s41
      %p52 = scmp.eq.s32.totalorder %s18, 0
      %p53 = por %p51, %p52
      %p54 = scmp.ne.s32.totalorder %s40, %s41
      %p55 = scmp.eq.s32.totalorder %s19, 1
      %p56 = por %p54, %p55
      %p58 = scmp.ne.s32.totalorder %s41, %s57
      %p59 = scmp.eq.s32.totalorder %s19, 0
      %p60 = por %p58, %p59
      %s61 = ssub.s32 %s20, %s32
      %s62 = ssub.s32 %s21, %s28
      %s63 = sor.u32 %s61, %s62
      %p64 = scmp.eq.s32.totalorder %s63, 0
      %s66 = sadd.s32 %s65, 1
      %s67 = scalar_select %p64, %s65, %s66
      %p70 = pneg %p64
      %p71 = scmp.eq.s32.totalorder %s13, 1
      %p72 = por %p70, %p71
      %p73 = scmp.ne.s32.totalorder %s65, %s68
      %p74 = scmp.eq.s32.totalorder %s13, 0
      %p75 = por %p73, %p74
      %p76 = scmp.ne.s32.totalorder %s65, %s68
      %p77 = scmp.eq.s32.totalorder %s18, 1
      %p78 = por %p76, %p77
      %p79 = scmp.ne.s32.totalorder %s68, %s69
      %p80 = scmp.eq.s32.totalorder %s18, 0
      %p81 = por %p79, %p80
      %p82 = scmp.ne.s32.totalorder %s68, %s69
      %p83 = scmp.eq.s32.totalorder %s19, 1
      %p84 = por %p82, %p83
      %p86 = scmp.ne.s32.totalorder %s69, %s85
      %p87 = scmp.eq.s32.totalorder %s19, 0
      %p88 = por %p86, %p87
      %s90 = sadd.s32 %s89, 1
      %p93 = scmp.eq.s32.totalorder %s13, 1
      %p94 = scmp.ne.s32.totalorder %s89, %s91
      %p95 = scmp.eq.s32.totalorder %s13, 0
      %p96 = por %p94, %p95
      %p97 = scmp.ne.s32.totalorder %s89, %s91
      %p98 = scmp.eq.s32.totalorder %s18, 1
      %p99 = por %p97, %p98
      %p100 = scmp.ne.s32.totalorder %s91, %s92
      %p101 = scmp.eq.s32.totalorder %s18, 0
      %p102 = por %p100, %p101
      %p103 = scmp.ne.s32.totalorder %s91, %s92
      %p104 = scmp.eq.s32.totalorder %s19, 1
      %p105 = por %p103, %p104
      %p107 = scmp.ne.s32.totalorder %s92, %s106
      %p108 = scmp.eq.s32.totalorder %s19, 0
      %p109 = por %p107, %p108
      %s111 = sadd.s32 %s110, 1
      %p114 = scmp.eq.s32.totalorder %s13, 1
      %p115 = scmp.ne.s32.totalorder %s110, %s112
      %p116 = scmp.eq.s32.totalorder %s13, 0
      %p117 = por %p115, %p116
      %p118 = scmp.ne.s32.totalorder %s110, %s112
      %p119 = scmp.eq.s32.totalorder %s18, 1
      %p120 = por %p118, %p119
      %p121 = scmp.ne.s32.totalorder %s112, %s113
      %p122 = scmp.eq.s32.totalorder %s18, 0
      %p123 = por %p121, %p122
      %p124 = scmp.ne.s32.totalorder %s112, %s113
      %p125 = scmp.eq.s32.totalorder %s19, 1
      %p126 = por %p124, %p125
      %p128 = scmp.ne.s32.totalorder %s113, %s127
      %p129 = scmp.eq.s32.totalorder %s19, 0
      %p130 = por %p128, %p129
      %s131 = ssub.s32 %s20, %s32
      %p132 = scmp.eq.s32.totalorder %s131, 0
      %s134 = sadd.s32 %s133, 1
      %s135 = scalar_select %p132, %s133, %s134
      %p138 = pneg %p132
      %p139 = scmp.eq.s32.totalorder %s13, 1
      %p140 = por %p138, %p139
      %p141 = scmp.ne.s32.totalorder %s133, %s136
      %p142 = scmp.eq.s32.totalorder %s13, 0
      %p143 = por %p141, %p142
      %p144 = scmp.ne.s32.totalorder %s133, %s136
      %p145 = scmp.eq.s32.totalorder %s18, 1
      %p146 = por %p144, %p145
      %p147 = scmp.ne.s32.totalorder %s136, %s137
      %p148 = scmp.eq.s32.totalorder %s18, 0
      %p149 = por %p147, %p148
      %p150 = scmp.ne.s32.totalorder %s136, %s137
      %p151 = scmp.eq.s32.totalorder %s19, 1
      %p152 = por %p150, %p151
      %p154 = scmp.ne.s32.totalorder %s137, %s153
      %p155 = scmp.eq.s32.totalorder %s19, 0
      %p156 = por %p154, %p155
      %p157 = scmp.le.s32.totalorder 1, %s13
      %p158 = scmp.lt.s32.totalorder %s13, 3
      %p159 = pnand %p157, %p158
      %p160 = pneg %p159
      // Predicated region
      $region9: #{weighted_head_pool.1} parent=5 // pred_check
        _
      $region10: #{weighted_head_pool.1} parent=5 // pred_check_branch
        %162 = sbr.rel (%p159) target = $region12
      $region11: #{weighted_head_pool.1} parent=5 // pred_region
        %s163 = ssub.s32 %s13, 1
        // Predicated region
        $region13: #{weighted_head_pool.1} parent=11 // pred_check
          %p164 = pneg %p102
        $region14: #{weighted_head_pool.1} parent=11 // pred_check_branch
          %166 = sbr.rel (%p164) target = $region16
        $region15: #{weighted_head_pool.1} parent=11 // pred_region
          _
        $region16: #{weighted_head_pool.1} parent=11 // pred_fallthru
          _
        // Predicated region
        $region17: #{weighted_head_pool.1} parent=11 // pred_check
          %p167 = pneg %p123
        $region18: #{weighted_head_pool.1} parent=11 // pred_check_branch
          %169 = sbr.rel (%p167) target = $region20
        $region19: #{weighted_head_pool.1} parent=11 // pred_region
          _
        $region20: #{weighted_head_pool.1} parent=11 // pred_fallthru
          _
      $region12: #{weighted_head_pool.1} parent=5 // pred_fallthru
        _
      %p170 = scmp.lt.s32.totalorder %s13, 2
      // Predicated region
      $region21: #{weighted_head_pool.1} parent=5 // pred_check
        %p171 = pneg %p170
      $region22: #{weighted_head_pool.1} parent=5 // pred_check_branch
        %173 = sbr.rel (%p171) target = $region24
      $region23: #{weighted_head_pool.1} parent=5 // pred_region
        // Predicated region
        $region25: #{weighted_head_pool.1} parent=23 // pred_check
          %p174 = pneg %p47
        $region26: #{weighted_head_pool.1} parent=23 // pred_check_branch
          %176 = sbr.rel (%p174) target = $region28
        $region27: #{weighted_head_pool.1} parent=23 // pred_region
          %s177 = smul.u32 2, %s21
          %p178 = scmp.lt.s32.totalorder %s20, 1
          %s179 = scalar_select %p178, %s20, 1
          %p180 = scmp.lt.s32.totalorder %s177, 1
          %s181 = scalar_select %p180, %s177, 1
          %s182 = smul.addr %s179, 2
          %s183 = sadd.s32 %s181, %s182
          %s184 = smul.addr %s183, 8
          %s185 = scalar_lea.vmem %s0, %s184
          %s186 = smul.u32 2, %s21
        $region28: #{weighted_head_pool.1} parent=23 // pred_fallthru
          _
        // Predicated region
        $region29: #{weighted_head_pool.1} parent=23 // pred_check
          %p187 = pneg %p75
        $region30: #{weighted_head_pool.1} parent=23 // pred_check_branch
          %189 = sbr.rel (%p187) target = $region32
        $region31: #{weighted_head_pool.1} parent=23 // pred_region
          %s190 = smul.u32 2, %s21
          %p191 = scmp.lt.s32.totalorder %s20, 1
          %s192 = scalar_select %p191, %s20, 1
          %p193 = scmp.lt.s32.totalorder %s190, 1
          %s194 = scalar_select %p193, %s190, 1
          %s195 = smul.addr %s192, 2
          %s196 = sadd.s32 %s194, %s195
          %s197 = smul.addr %s196, 8
          %s198 = scalar_lea.vmem %s1, %s197
          %s199 = smul.u32 2, %s21
        $region32: #{weighted_head_pool.1} parent=23 // pred_fallthru
          _
      $region24: #{weighted_head_pool.1} parent=5 // pred_fallthru
        _
      %p200 = scmp.le.s32.totalorder 1, %s13
      %p201 = scmp.lt.s32.totalorder %s13, 3
      %p202 = pnand %p200, %p201
      %p203 = pneg %p202
      // Predicated region
      $region33: #{weighted_head_pool.1} parent=5 // pred_check
        _
      $region34: #{weighted_head_pool.1} parent=5 // pred_check_branch
        %205 = sbr.rel (%p202) target = $region36
      $region35: #{weighted_head_pool.1} parent=5 // pred_region
        %s206 = ssub.s32 %s13, 1
        %s207 = smul.u32 2, %s23
        %p208 = scmp.lt.s32.totalorder %s22, 1
        %s209 = scalar_select %p208, %s22, 1
        %p210 = scmp.lt.s32.totalorder %s207, 1
        %s211 = scalar_select %p210, %s207, 1
        %s212 = smul.addr %s209, 2
        %s213 = sadd.s32 %s211, %s212
        %s214 = smul.addr %s213, 8
        %s215 = scalar_lea.vmem %s0, %s214
        %p216 = pneg %p53
        %p217 = pneg %p50
        %s218 = smul.u32 2, %s23
        %p219 = scmp.lt.s32.totalorder %s22, 1
        %s220 = scalar_select %p219, %s22, 1
        %p221 = scmp.lt.s32.totalorder %s218, 1
        %s222 = scalar_select %p221, %s218, 1
        %s223 = smul.addr %s220, 2
        %s224 = sadd.s32 %s222, %s223
        %s225 = smul.addr %s224, 8
        %s226 = scalar_lea.vmem %s1, %s225
        %p227 = pneg %p81
        %p228 = pneg %p78
        %p229 = pneg %p102
        %p230 = pneg %p99
        %p231 = pneg %p123
        %p232 = pneg %p120
        %p233 = pneg %p149
        %p234 = pneg %p146
        %s235 = sand.u32 %s136, 1
        %s236 = scalar_lea.sflag [#allocation5], %s235
        %s237 = sand.u32 %s136, 1
        %s238 = scalar_lea.vmem [#allocation4], %s237
        %s239 = smul.u32 2, %s23
        %p240 = scmp.lt.s32.totalorder %s22, 1
        %s241 = scalar_select %p240, %s22, 1
        %p242 = scmp.lt.s32.totalorder %s239, 1
        %s243 = scalar_select %p242, %s239, 1
        %s244 = smul.addr %s241, 2
        %s245 = sadd.s32 %s243, %s244
        %s246 = smul.addr %s245, 8
        %s247 = scalar_lea.vmem %s0, %s246
        %s248 = smul.u32 2, %s23
        %s249 = smul.u32 2, %s23
        %p250 = scmp.lt.s32.totalorder %s22, 1
        %s251 = scalar_select %p250, %s22, 1
        %p252 = scmp.lt.s32.totalorder %s249, 1
        %s253 = scalar_select %p252, %s249, 1
        %s254 = smul.addr %s251, 2
        %s255 = sadd.s32 %s253, %s254
        %s256 = smul.addr %s255, 8
        %s257 = scalar_lea.vmem %s1, %s256
        %s258 = smul.u32 2, %s23
        %p259 = scmp.eq.s32.totalorder %s23, 0
        // Predicated region
        $region37: #{weighted_head_pool.1} parent=35 // pred_check
          %p260 = pneg %p259
        $region38: #{weighted_head_pool.1} parent=35 // pred_check_branch
          %262 = sbr.rel (%p260) target = $region40
        $region39: #{weighted_head_pool.1} parent=35 // pred_region
          %vm263 = vcmask 261120
          %264 = vst.msk [vmem:[#allocation2] sm:$0xff] %vm263, 0.0
          %vm265 = vcmask 7168
          %266 = vst.msk [vmem:[#allocation3] sm:$0xff] %vm265, 0.0
        $region40: #{weighted_head_pool.1} parent=35 // pred_fallthru
          _
        %v267 = vld [vmem:[%s247] sm:$0xff]
        %v268 = vld [vmem:[%s247 + $0x8] sm:$0xff]
        %v269 = vld [vmem:[%s257] sm:$0xff]
        %v270 = vld [vmem:[%s257 + $0x8] sm:$0xff]
        %vm271 = vcmp.gt.f32.partialorder %v269, 0.0
        %vm272 = vcmp.gt.f32.partialorder %v270, 0.0
        %v273 = vsel %vm271, 1, 0
        %v274 = vsel %vm272, 1, 0
        %275 = vset.pattern.permute.xlu0 0
        %276 = vperm.xlu0 %275, %v273
        %v277 = vpop.permute.xlu0 %276
        %278 = vset.pattern.permute.xlu0 0
        %279 = vperm.xlu0 %278, %v274
        %v280 = vpop.permute.xlu0 %279
        %vm281 = vcmp.eq.s32.totalorder %v277, 1
        %vm282 = vcmp.eq.s32.totalorder %v280, 1
        %v283 = vsel %vm281, %v267, 0.0
        %v284 = vsel %vm282, %v268, 0.0
        %v285 = vld [vmem:[#allocation2] sm:$0xff]
        %vm286 = vcmask 261120
        %v287 = vsel %vm286, %v283, 0.0
        %v288 = vsel %vm286, %v284, 0.0
        %v289 = vadd.f32 %v287, %v288
        %v290 = vadd.f32 %v285, %v289
        %291 = vst.msk [vmem:[#allocation2] sm:$0xff] %vm286, %v290
        %v292 = vld [vmem:[#allocation3] sm:$0xff]
        %vm293 = vcmask 7168
        %v294 = vsel %vm293, %v269, 0.0
        %v295 = vsel %vm293, %v270, 0.0
        %v296 = vadd.f32 %v294, %v295
        %v297 = vadd.f32 %v292, %v296
        %298 = vst.msk [vmem:[#allocation3] sm:$0xff] %vm293, %v297
        // Predicated region
        $region41: #{weighted_head_pool.1} parent=35 // pred_check
          %p299 = pneg %p259
        $region42: #{weighted_head_pool.1} parent=35 // pred_check_branch
          %301 = sbr.rel (%p299) target = $region44
        $region43: #{weighted_head_pool.1} parent=35 // pred_region
          %v302 = vld [vmem:[#allocation2] sm:$0xff]
          %v303 = vsel %vm286, %v302, 0.0
          %v304 = vrot.slane %v303, 4
          %v305 = vadd.f32 %v303, %v304
          %v306 = vrot.slane %v305, 2
          %v307 = vadd.f32 %v305, %v306
          %v308 = vrot.slane %v307, 1
          %v309 = vadd.f32 %v307, %v308
          %v310 = vld [vmem:[#allocation3] sm:$0xff]
          %v311 = vsel %vm293, %v310, 0.0
          %v312 = vrot.slane %v311, 4
          %v313 = vadd.f32 %v311, %v312
          %v314 = vrot.slane %v313, 2
          %v315 = vadd.f32 %v313, %v314
          %v316 = vrot.slane %v315, 1
          %v317 = vadd.f32 %v315, %v316
          %v318 = vmax.f32 %v317, 1.0
          %320 = vset.pattern.permute.xlu0 0
          %321 = vperm.xlu0 %320, %v318
          %v322 = vpop.permute.xlu0 %321
          %v324 = vrcp.pop %v322
          %v325 = vmul.f32 %v309, %v324
          %v326 = vld [vmem:[%s2] sm:$0xff]
          %v327 = vld [vmem:[%s2 + $0x8] sm:$0xff]
          %v328 = vld [vmem:[%s2 + $0x10] sm:$0xff]
          %v329 = vld [vmem:[%s2 + $0x18] sm:$0xff]
          %v330 = vld [vmem:[%s3] sm:$0x1]
          %v332 = vsel %vm286, %v325, 0
          %334 = vmatprep.subr.mxu0 0.0
          %335 = vmatpush1.msra.mxu0 %v326
          %336 = vmatprep.subr.mxu0 0.0
          %337 = vmatpush1.msra.mxu0 %v327
          %338 = vmatprep.subr.mxu0 0.0
          %339 = vmatpush1.msra.mxu0 %v328
          %340 = vmatprep.subr.mxu0 0.0
          %341 = vmatpush1.msra.mxu0 %v329
          %342 = vmatprep.subr.mxu0 0.0
          %343 = vmatpush1.msra.mxu0 0.0
          %344 = vmatprep.subr.mxu0 0.0
          %345 = vmatpush1.msra.mxu0 0.0
          %346 = vmatprep.subr.mxu0 0.0
          %347 = vmatpush1.msra.mxu0 0.0
          %348 = vmatprep.subr.mxu0 0.0
          %349 = vmatpush1.msra.mxu0 0.0
          %350 = vmatprep.subr.mxu0 0.0
          %351 = vmatpush1.msra.mxu0 0.0
          %352 = vmatprep.subr.mxu0 0.0
          %353 = vmatpush1.msra.mxu0 0.0
          %354 = vmatprep.subr.mxu0 0.0
          %355 = vmatpush1.msra.mxu0 0.0
          %356 = vmatprep.subr.mxu0 0.0
          %357 = vmatpush1.msra.mxu0 0.0
          %358 = vmatprep.subr.mxu0 0.0
          %359 = vmatpush1.msra.mxu0 0.0
          %360 = vmatprep.subr.mxu0 0.0
          %361 = vmatpush1.msra.mxu0 0.0
          %362 = vmatprep.subr.mxu0 0.0
          %363 = vmatpush1.msra.mxu0 0.0
          %364 = vmatprep.subr.mxu0 0.0
          %365 = vmatpush1.msra.mxu0 0.0
          %366 = vmatprep.subr.mxu0 0.0
          %367 = vmatpush1.msra.mxu0 0.0
          %368 = vmatprep.subr.mxu0 0.0
          %369 = vmatpush1.msra.mxu0 0.0
          %370 = vmatprep.subr.mxu0 0.0
          %371 = vmatpush1.msra.mxu0 0.0
          %372 = vmatprep.subr.mxu0 0.0
          %373 = vmatpush1.msra.mxu0 0.0
          %374 = vmatprep.subr.mxu0 0.0
          %375 = vmatpush1.msra.mxu0 0.0
          %376 = vmatprep.subr.mxu0 0.0
          %377 = vmatpush1.msra.mxu0 0.0
          %378 = vmatprep.subr.mxu0 0.0
          %379 = vmatpush1.msra.mxu0 0.0
          %380 = vmatprep.subr.mxu0 0.0
          %381 = vmatpush1.msra.mxu0 0.0
          %382 = vmatprep.subr.mxu0 0.0
          %383 = vmatpush1.msra.mxu0 0.0
          %384 = vmatprep.subr.mxu0 0.0
          %385 = vmatpush1.msra.mxu0 0.0
          %386 = vmatprep.subr.mxu0 0.0
          %387 = vmatpush1.msra.mxu0 0.0
          %388 = vmatprep.subr.mxu0 0.0
          %389 = vmatpush1.msra.mxu0 0.0
          %390 = vmatprep.subr.mxu0 0.0
          %391 = vmatpush1.msra.mxu0 0.0
          %392 = vmatprep.subr.mxu0 0.0
          %393 = vmatpush1.msra.mxu0 0.0
          %394 = vmatprep.subr.mxu0 0.0
          %395 = vmatpush1.msra.mxu0 0.0
          %396 = vmatprep.subr.mxu0 0.0
          %397 = vmatpush1.msra.mxu0 0.0
          %398 = vmatprep.mubr.f32.mxu0 0.0
          %399 = vmatmul.mubr.f32.gmra.mrb[0].mxu0 %v332
          %v400 = vpop.f32.mrb[0].mxu0
          %v401 = vadd.f32 %v330, %v400
          %v402 = vpop.f32.mrb[0].mxu0
          %403 = vdwg.mxu0
          %vm404 = vcmask 253952
          %405 = vst.msk [vmem:[%s238] sm:$0x1] %vm404, %v401
        $region44: #{weighted_head_pool.1} parent=35 // pred_fallthru
          _
        %s406 = sand.u32 %s136, 1
        %s407 = scalar_lea.sflag [#allocation5], %s406
        %s408 = sand.u32 %s136, 1
        %s409 = scalar_lea.vmem [#allocation4], %s408
        // Predicated region
        $region45: #{weighted_head_pool.1} parent=35 // pred_check
          %p410 = pneg %p146
        $region46: #{weighted_head_pool.1} parent=35 // pred_check_branch
          %412 = sbr.rel (%p410) target = $region48
        $region47: #{weighted_head_pool.1} parent=35 // pred_region
          %s414 = ssub.s32 16, 16
          %415 = vsyncadd %s407, %s414
          %s416 = smul.addr %s22, 16
          %s417 = scalar_lea.hbm %s4, %s416
          %s419 = sshll.u32 %s409, 4
          %s420 = int_to_ptr.vmem [resolvable:$true] %s419
          %422 = dma.vmem_to_hbm [thread:$0]  %s420, 16, %s417, %s407
        $region48: #{weighted_head_pool.1} parent=35 // pred_fallthru
          _
      $region36: #{weighted_head_pool.1} parent=5 // pred_fallthru
        _
      %p423 = scmp.le.s32.totalorder 2, %s13
      // Predicated region
      $region49: #{weighted_head_pool.1} parent=5 // pred_check
        %p424 = pneg %p423
      $region50: #{weighted_head_pool.1} parent=5 // pred_check_branch
        %426 = sbr.rel (%p424) target = $region52
      $region51: #{weighted_head_pool.1} parent=5 // pred_region
        %s427 = ssub.s32 %s13, 2
        // Predicated region
        $region53: #{weighted_head_pool.1} parent=51 // pred_check
          %p428 = pneg %p152
        $region54: #{weighted_head_pool.1} parent=51 // pred_check_branch
          %430 = sbr.rel (%p428) target = $region56
        $region55: #{weighted_head_pool.1} parent=51 // pred_region
          %s431 = sand.u32 %s137, 1
          %s432 = scalar_lea.sflag [#allocation5], %s431
          %s433 = sand.u32 %s137, 1
          %s434 = scalar_lea.vmem [#allocation4], %s433
          %435 = dma.done %s432, 16
        $region56: #{weighted_head_pool.1} parent=51 // pred_fallthru
          _
      $region52: #{weighted_head_pool.1} parent=5 // pred_fallthru
        _
    $region6: #{weighted_head_pool.1} parent=1 // loop_footer
      %s17 = sadd.s32 1, %s13
    $region7: #{weighted_head_pool.1} parent=1 // loop_footer_branch
      %12 = sbr.rel target = $region3
    $region8: #{weighted_head_pool.1} parent=1 // loop_exit
      _
    %436 = vsyncpa [#allocation5], 1
    %s437 = scalar_lea.sflag [#allocation5], 1
    %438 = vsyncpa %s437, 1

</llo_original>
